<compile_context>
chip_gen: v5e
topology: v5e:2x2
jax: 0.10.0
libtpu: 0.0.40
codegen_flags: <defaults>
</compile_context>

<pallas_src>
import jax
import jax.numpy as jnp
from jax.experimental import pallas as pl
from jax.experimental.pallas import tpu as pltpu

_LANE = 128        # TPU lane width (last-dim register width)
_TILE_B = 512      # batch tile: 2 * 512 * 2048 * 4B = 8 MiB double-buffered f32
                   # activations -> fits v5e's 16 MiB default scoped VMEM with
                   # headroom; keeps grid >= 2 for B > 512 (v7x megacore split)
_SMALL_BATCH_FUSE = 256   # below this, prefer XLA fusion over a standalone call


def _head_kernel(x_ref, w_ref, o_ref):
    # x arrives as f32 straight from HBM; cast to the MXU feed dtype (bf16)
    # in-kernel so the convert rides the VPU under the activation DMA instead
    # of being a separate HBM round-trip in the wrapper.
    x = x_ref[...].astype(w_ref.dtype)
    o_ref[...] = jnp.dot(
        x, w_ref[...], preferred_element_type=jnp.float32
    ).astype(o_ref.dtype)


def prepare_linear_params(w, b, *, compute_dtype=jnp.bfloat16):
    """One-time weight prep (parameter-load time, not per forward):
    zero-pad out_features up to a full 128-lane register and cast to the MXU
    feed dtype.  w: (in_features, out_features) f32, b: (out_features,) f32."""
    K, N = w.shape
    n_pad = -N % _LANE
    w_padded = jnp.pad(w, ((0, 0), (0, n_pad))).astype(compute_dtype)
    return w_padded, b.astype(jnp.float32)


def classifier_head(x_flat, w_padded, b, *, force_pallas=False):
    """x_flat: (B, K) f32, w_padded: (K, Np) bf16 (Np = 128-mult), b: (N,) f32.
    Returns (B, N) f32 logits."""
    B, K = x_flat.shape
    Kw, Np = w_padded.shape
    assert K == Kw and Np % _LANE == 0
    N = b.shape[0]

    # Small-batch path: the 2048->N GEMV is launch/step-overhead dominated;
    # let XLA fuse it into the surrounding (jitted) graph instead.
    if not force_pallas and B <= _SMALL_BATCH_FUSE:
        y = jnp.dot(
            x_flat.astype(w_padded.dtype), w_padded[:, :N],
            preferred_element_type=jnp.float32,
        )
        return y + b

    # Row tiling: single block for small B (block == full array dims is always
    # legal); otherwise pad B up to a tile multiple so every batch size gets
    # the pipelined, megacore-parallel path with bounded VMEM.
    if B <= _TILE_B:
        tb, Bp = B, B
    else:
        tb = _TILE_B
        Bp = pl.cdiv(B, tb) * tb
    if Bp != B:
        x_flat = jnp.pad(x_flat, ((0, Bp - B), (0, 0)))

    out_padded = pl.pallas_call(
        _head_kernel,
        out_shape=jax.ShapeDtypeStruct((Bp, Np), jnp.float32),
        grid=(Bp // tb,),
        in_specs=[
            pl.BlockSpec((tb, K), lambda i: (i, 0)),    # f32 activation rows
            pl.BlockSpec((K, Np), lambda i: (0, 0)),    # resident bf16 weight
        ],
        out_specs=pl.BlockSpec((tb, Np), lambda i: (i, 0)),
        compiler_params=pltpu.CompilerParams(
            dimension_semantics=("parallel",),
        ),
    )(x_flat, w_padded)

    # Slice back to real (B, N) and fold the bias add here (fused by XLA when
    # the caller jits the forward); keeps the tiny bias out of the kernel.
    return out_padded[:B, :N] + b


def multilabel_classifier2_forward(features_nchw, params, *, force_pallas=False):
    """Mirrors MultilabelClassifier2.forward starting from backbone features.

    features_nchw: (B, 2048, 1, 1) — output of self.model_wo_fc(x).
    """
    # torch.flatten(x, 1)
    x = features_nchw.reshape(features_nchw.shape[0], -1)
    # TODO(synk): nn.Dropout(p=0.2) is identity at inference (eval mode);
    # training-mode stochastic dropout is not implemented here.
    logits = classifier_head(
        x, params["w_padded"], params["b"], force_pallas=force_pallas
    )
    return {"label": logits}


def init_params(key, in_features=2048, n_out=3):
    """Deterministic PyTorch-style Linear init: U(-1/sqrt(in), 1/sqrt(in)).
    The lane-padded bf16 weight slab is prepared once here, not per forward."""
    kw, kb = jax.random.split(key)
    bound = 1.0 / jnp.sqrt(jnp.float32(in_features))
    # Stored as (in_features, out_features) for the kernel (transpose of
    # PyTorch's (out, in) layout).
    w = jax.random.uniform(
        kw, (in_features, n_out), jnp.float32, minval=-bound, maxval=bound
    )
    b = jax.random.uniform(
        kb, (n_out,), jnp.float32, minval=-bound, maxval=bound
    )
    w_padded, b_f32 = prepare_linear_params(w, b)
    return {"w": w, "b": b_f32, "w_padded": w_padded}


if __name__ == "__main__":
    key = jax.random.PRNGKey(0)
    k_feat, k_param, k_feat2 = jax.random.split(key, 3)

    # Backbone (model_wo_fc) output shape dictated by the module: 2048 features.
    B, C, H, W = 2, 2048, 1, 1
    features = jax.random.normal(k_feat, (B, C, H, W), dtype=jnp.float32)
    params = init_params(k_param, in_features=C * H * W, n_out=3)

    # Small-batch demo; force the Pallas path so the kernel is exercised.
    out = multilabel_classifier2_forward(features, params, force_pallas=True)
    logits = jax.block_until_ready(out["label"])
    assert logits.shape == (B, 3)

    w_bf = params["w"].astype(jnp.bfloat16).astype(jnp.float32)

    # Reference with the same bf16 MXU feed + f32 accumulation.
    x_flat = features.reshape(B, -1)
    xb = x_flat.astype(jnp.bfloat16).astype(jnp.float32)
    ref_bf16 = xb @ w_bf + params["b"]
    assert jnp.allclose(logits, ref_bf16, rtol=1e-3, atol=1e-3)

    # Loose check against full-f32 semantics (bf16 rounding only).
    ref_f32 = x_flat @ params["w"] + params["b"]
    assert jnp.allclose(logits, ref_f32, rtol=3e-2, atol=3e-2)

    # Larger, non-tile-multiple batch: exercises the pad-to-tile + multi-step
    # parallel-grid path (600 -> padded 1024, two 512-row tiles).
    B2 = 600
    x2 = jax.random.normal(k_feat2, (B2, C), dtype=jnp.float32)
    logits2 = classifier_head(
        x2, params["w_padded"], params["b"], force_pallas=True
    )
    logits2 = jax.block_until_ready(logits2)
    assert logits2.shape == (B2, 3)
    ref2 = x2.astype(jnp.bfloat16).astype(jnp.float32) @ w_bf + params["b"]
    assert jnp.allclose(logits2, ref2, rtol=1e-3, atol=1e-3)

    print("KERNEL_OK")
</pallas_src>

<mosaic_0001>
module attributes {stable_mosaic.version = 11 : i64} {
  func.func @_head_kernel(%arg0: i32, %arg1: memref<2x2048xf32, #tpu.memory_space<vmem>>, %arg2: memref<2048x128xbf16, #tpu.memory_space<vmem>>, %arg3: memref<2x128xf32, #tpu.memory_space<vmem>>) attributes {dimension_semantics = [#tpu.dimension_semantics<parallel>], iteration_bounds = array<i64: 1>, scalar_prefetch = 0 : i64, scratch_operands = 0 : i64, tpu.core_type = #tpu.core_type<tc>, window_params = [{transform_indices = @transform_0, window_bounds = array<i64: 2, 2048>}, {pipeline_mode = #tpu.pipeline_mode<synchronous>, transform_indices = @transform_1, window_bounds = array<i64: 2048, 128>}, {transform_indices = @transform_2, window_bounds = array<i64: 2, 128>}]} {
    %c0 = arith.constant 0 : index
    %c0_0 = arith.constant 0 : index
    %0 = vector.load %arg1[%c0, %c0_0] : memref<2x2048xf32, #tpu.memory_space<vmem>>, vector<2x2048xf32>
    %1 = arith.truncf %0 : vector<2x2048xf32> to vector<2x2048xbf16>
    %c0_1 = arith.constant 0 : index
    %c0_2 = arith.constant 0 : index
    %2 = vector.load %arg2[%c0_1, %c0_2] : memref<2048x128xbf16, #tpu.memory_space<vmem>>, vector<2048x128xbf16>
    %cst = arith.constant dense<0.000000e+00> : vector<2x128xf32>
    %3 = tpu.matmul %1, %2, %cst {dimension_numbers = #tpu.dot_dimension_numbers<[1], [0], [0], [1], [0, 0, 1, 1], [], []>} : vector<2x2048xbf16>, vector<2048x128xbf16>, vector<2x128xf32> -> vector<2x128xf32>
    %c0_3 = arith.constant 0 : index
    %c0_4 = arith.constant 0 : index
    %4 = vector.load %arg3[%c0_3, %c0_4] : memref<2x128xf32, #tpu.memory_space<vmem>>, vector<2x128xf32>
    tpu.vector_store %arg3[%c0_3, %c0_4], %3 {strides = array<i32>} : memref<2x128xf32, #tpu.memory_space<vmem>>, vector<2x128xf32>,
    return
  }
  func.func @transform_0(%arg0: i32) -> (i32, i32) {
    %c0_i32 = arith.constant 0 : i32
    %c0_i32_0 = arith.constant 0 : i32
    return %arg0, %c0_i32 : i32, i32
  }
  func.func @transform_1(%arg0: i32) -> (i32, i32) {
    %c0_i32 = arith.constant 0 : i32
    %c0_i32_0 = arith.constant 0 : i32
    %c0_i32_1 = arith.constant 0 : i32
    return %c0_i32, %c0_i32_0 : i32, i32
  }
  func.func @transform_2(%arg0: i32) -> (i32, i32) {
    %c0_i32 = arith.constant 0 : i32
    %c0_i32_0 = arith.constant 0 : i32
    return %arg0, %c0_i32 : i32, i32
  }
}

</mosaic_0001>

<llo_original>
// kernel: tpu_custom_call.1
$region0: #{tpu_custom_call.1}
  #allocation0 [shape = 'u32[]', space=smem, size = 0x4, offset = 0x4, fixed_abs, tag = 'smem constant byte address 0x4 - core index']
  #allocation1 [shape = 'u32[72,128]{1,0:T(1,128)}', space=vmem, size = 0x9000, scoped, tag = 'internal scratch']
  %s0 = inlined_call_operand.hbm [shape: f32[2,2048], index: 0, kind: input, shape index: {}]
  %s1 = inlined_call_operand.hbm [shape: bf16[2048,128], index: 1, kind: input, shape index: {}]
  %s2 = inlined_call_operand.hbm [shape: f32[2,128], index: 2, kind: output, shape index: {}]
  %s3 = sld [smem:[#allocation0]]
  $region26: #{tpu_custom_call.1} parent=0
    _
  %s5 = ssub.s32 1, %s3
  %s6 = scalar_select 0, %s5, %s3
  $region1: #{tpu_custom_call.1} parent=0
    #allocation2 [shape = 'u8[16384]{0}', space=vmem, size = 0x4000, scoped, tag = 'input window, operand 0, single buffered']
    #allocation3 [shape = 's32[1]{0}', space=sflag, size = 0x4, scoped, tag = 'scoped memory for tpu_custom_call.1']
    #allocation4 [shape = 's32[1]{0}', space=sflag, size = 0x4, scoped, tag = 'scoped memory for tpu_custom_call.1']
    #allocation5 [shape = 'u8[524288]{0}', space=vmem, size = 0x80000, scoped, tag = 'input window, operand 1, single buffered']
    #allocation6 [shape = 's32[1]{0}', space=sflag, size = 0x4, scoped, tag = 'scoped memory for tpu_custom_call.1']
    #allocation7 [shape = 'u8[1024]{0}', space=vmem, size = 0x400, scoped, tag = 'output window, operand 0, single buffered']
    %7 = vsyncpa [#allocation3], 0
    %8 = vsyncpa [#allocation6], 0
    %9 = vsyncpa [#allocation4], 0
    // Predicated region
    $region2: #{tpu_custom_call.1} parent=1 // pred_check
      _
    $region3: #{tpu_custom_call.1} parent=1 // pred_check_branch
      %11 = sbr.rel (0) target = $region5
    $region4: #{tpu_custom_call.1} parent=1 // pred_region
      %13 = vsyncadd [#allocation3], 0
      %s15 = sshll.u32 %s0, 4
      %s16 = int_to_ptr.hbm [resolvable:$true] %s15
      %s17 = sshll.u32 [#allocation2], 4
      %s18 = int_to_ptr.vmem [resolvable:$true] %s17
      %20 = dma.hbm_to_vmem [thread:$0]  %s16, 512, %s18, [#allocation3]
    $region5: #{tpu_custom_call.1} parent=1 // pred_fallthru
      _
    // Predicated region
    $region6: #{tpu_custom_call.1} parent=1 // pred_check
      _
    $region7: #{tpu_custom_call.1} parent=1 // pred_check_branch
      %22 = sbr.rel (0) target = $region9
    $region8: #{tpu_custom_call.1} parent=1 // pred_region
      %24 = vsyncadd [#allocation6], 0
      %s25 = sshll.u32 %s1, 4
      %s26 = int_to_ptr.hbm [resolvable:$true] %s25
      %s27 = sshll.u32 [#allocation5], 4
      %s28 = int_to_ptr.vmem [resolvable:$true] %s27
      %33 = dma.hbm_to_vmem [thread:$0]  %s26, 16384, %s28, [#allocation6], 64, 64, 4
    $region9: #{tpu_custom_call.1} parent=1 // pred_fallthru
      _
    // Predicated region
    $region10: #{tpu_custom_call.1} parent=1 // pred_check
      _
    $region11: #{tpu_custom_call.1} parent=1 // pred_check_branch
      %35 = sbr.rel (0) target = $region13
    $region12: #{tpu_custom_call.1} parent=1 // pred_region
      %37 = dma.done [#allocation3], 512
    $region13: #{tpu_custom_call.1} parent=1 // pred_fallthru
      _
    // Predicated region
    $region14: #{tpu_custom_call.1} parent=1 // pred_check
      _
    $region15: #{tpu_custom_call.1} parent=1 // pred_check_branch
      %39 = sbr.rel (0) target = $region17
    $region16: #{tpu_custom_call.1} parent=1 // pred_region
      %41 = dma.done [#allocation6], 16384
    $region17: #{tpu_custom_call.1} parent=1 // pred_fallthru
      _
    %v42 = vld [vmem:[#allocation2] sm:$0xff]
    %v43 = vld [vmem:[#allocation2 + $0x8] sm:$0xff]
    %v44 = vld [vmem:[#allocation2 + $0x10] sm:$0xff]
    %v45 = vld [vmem:[#allocation2 + $0x18] sm:$0xff]
    %50 = vst [vmem:[#allocation1] ss:$4 sm:$0xff] %v42
    %s51 = scalar_lea.vmem [#allocation1], 32
    %52 = vst [vmem:[%s51] ss:$4 sm:$0xff] %v43
    %v53 = vld.sshfl [vmem:[#allocation1] sm:$0xff pattern:$0x73625140]
    %v54 = vld.sshfl [vmem:[#allocation1 + $0x8] sm:$0xff pattern:$0x73625140]
    %v55 = vld.sshfl [vmem:[#allocation1 + $0x10] sm:$0xff pattern:$0x73625140]
    %v56 = vld.sshfl [vmem:[#allocation1 + $0x18] sm:$0xff pattern:$0x73625140]
    %v57 = vld.sshfl [vmem:[#allocation1 + $0x20] sm:$0xff pattern:$0x73625140]
    %v58 = vld.sshfl [vmem:[#allocation1 + $0x28] sm:$0xff pattern:$0x73625140]
    %v59 = vld.sshfl [vmem:[#allocation1 + $0x30] sm:$0xff pattern:$0x73625140]
    %v60 = vld.sshfl [vmem:[#allocation1 + $0x38] sm:$0xff pattern:$0x73625140]
    %61 = vst [vmem:[#allocation1] ss:$4 sm:$0xff] %v44
    %62 = vst [vmem:[%s51] ss:$4 sm:$0xff] %v45
    %v63 = vld.sshfl [vmem:[#allocation1] sm:$0xff pattern:$0x73625140]
    %v64 = vld.sshfl [vmem:[#allocation1 + $0x8] sm:$0xff pattern:$0x73625140]
    %v65 = vld.sshfl [vmem:[#allocation1 + $0x10] sm:$0xff pattern:$0x73625140]
    %v66 = vld.sshfl [vmem:[#allocation1 + $0x18] sm:$0xff pattern:$0x73625140]
    %v67 = vld.sshfl [vmem:[#allocation1 + $0x20] sm:$0xff pattern:$0x73625140]
    %v68 = vld.sshfl [vmem:[#allocation1 + $0x28] sm:$0xff pattern:$0x73625140]
    %v69 = vld.sshfl [vmem:[#allocation1 + $0x30] sm:$0xff pattern:$0x73625140]
    %v70 = vld.sshfl [vmem:[#allocation1 + $0x38] sm:$0xff pattern:$0x73625140]
    %v87 = vpack.c.bf16 %v53, %v53
    %v88 = vpack.c.bf16 %v54, %v54
    %v89 = vpack.c.bf16 %v55, %v55
    %v90 = vpack.c.bf16 %v56, %v56
    %v91 = vpack.c.bf16 %v57, %v57
    %v92 = vpack.c.bf16 %v58, %v58
    %v93 = vpack.c.bf16 %v59, %v59
    %v94 = vpack.c.bf16 %v60, %v60
    %v95 = vpack.c.bf16 %v63, %v63
    %v96 = vpack.c.bf16 %v64, %v64
    %v97 = vpack.c.bf16 %v65, %v65
    %v98 = vpack.c.bf16 %v66, %v66
    %v99 = vpack.c.bf16 %v67, %v67
    %v100 = vpack.c.bf16 %v68, %v68
    %v101 = vpack.c.bf16 %v69, %v69
    %v102 = vpack.c.bf16 %v70, %v70
    %v103 = vld [vmem:[#allocation5] sm:$0xf]
    %v104 = vld [vmem:[#allocation5 + $0x4] sm:$0xf]
    %v105 = vld [vmem:[#allocation5 + $0x8] sm:$0xf]
    %v106 = vld [vmem:[#allocation5 + $0xc] sm:$0xf]
    %v107 = vld [vmem:[#allocation5 + $0x10] sm:$0xf]
    %v108 = vld [vmem:[#allocation5 + $0x14] sm:$0xf]
    %v109 = vld [vmem:[#allocation5 + $0x18] sm:$0xf]
    %v110 = vld [vmem:[#allocation5 + $0x1c] sm:$0xf]
    %v111 = vld [vmem:[#allocation5 + $0x20] sm:$0xf]
    %v112 = vld [vmem:[#allocation5 + $0x24] sm:$0xf]
    %v113 = vld [vmem:[#allocation5 + $0x28] sm:$0xf]
    %v114 = vld [vmem:[#allocation5 + $0x2c] sm:$0xf]
    %v115 = vld [vmem:[#allocation5 + $0x30] sm:$0xf]
    %v116 = vld [vmem:[#allocation5 + $0x34] sm:$0xf]
    %v117 = vld [vmem:[#allocation5 + $0x38] sm:$0xf]
    %v118 = vld [vmem:[#allocation5 + $0x3c] sm:$0xf]
    %v119 = vld [vmem:[#allocation5 + $0x40] sm:$0xf]
    %v120 = vld [vmem:[#allocation5 + $0x44] sm:$0xf]
    %v121 = vld [vmem:[#allocation5 + $0x48] sm:$0xf]
    %v122 = vld [vmem:[#allocation5 + $0x4c] sm:$0xf]
    %v123 = vld [vmem:[#allocation5 + $0x50] sm:$0xf]
    %v124 = vld [vmem:[#allocation5 + $0x54] sm:$0xf]
    %v125 = vld [vmem:[#allocation5 + $0x58] sm:$0xf]
    %v126 = vld [vmem:[#allocation5 + $0x5c] sm:$0xf]
    %v127 = vld [vmem:[#allocation5 + $0x60] sm:$0xf]
    %v128 = vld [vmem:[#allocation5 + $0x64] sm:$0xf]
    %v129 = vld [vmem:[#allocation5 + $0x68] sm:$0xf]
    %v130 = vld [vmem:[#allocation5 + $0x6c] sm:$0xf]
    %v131 = vld [vmem:[#allocation5 + $0x70] sm:$0xf]
    %v132 = vld [vmem:[#allocation5 + $0x74] sm:$0xf]
    %v133 = vld [vmem:[#allocation5 + $0x78] sm:$0xf]
    %v134 = vld [vmem:[#allocation5 + $0x7c] sm:$0xf]
    %v135 = vld [vmem:[#allocation5 + $0x80] sm:$0xf]
    %v136 = vld [vmem:[#allocation5 + $0x84] sm:$0xf]
    %v137 = vld [vmem:[#allocation5 + $0x88] sm:$0xf]
    %v138 = vld [vmem:[#allocation5 + $0x8c] sm:$0xf]
    %v139 = vld [vmem:[#allocation5 + $0x90] sm:$0xf]
    %v140 = vld [vmem:[#allocation5 + $0x94] sm:$0xf]
    %v141 = vld [vmem:[#allocation5 + $0x98] sm:$0xf]
    %v142 = vld [vmem:[#allocation5 + $0x9c] sm:$0xf]
    %v143 = vld [vmem:[#allocation5 + $0xa0] sm:$0xf]
    %v144 = vld [vmem:[#allocation5 + $0xa4] sm:$0xf]
    %v145 = vld [vmem:[#allocation5 + $0xa8] sm:$0xf]
    %v146 = vld [vmem:[#allocation5 + $0xac] sm:$0xf]
    %v147 = vld [vmem:[#allocation5 + $0xb0] sm:$0xf]
    %v148 = vld [vmem:[#allocation5 + $0xb4] sm:$0xf]
    %v149 = vld [vmem:[#allocation5 + $0xb8] sm:$0xf]
    %v150 = vld [vmem:[#allocation5 + $0xbc] sm:$0xf]
    %v151 = vld [vmem:[#allocation5 + $0xc0] sm:$0xf]
    %v152 = vld [vmem:[#allocation5 + $0xc4] sm:$0xf]
    %v153 = vld [vmem:[#allocation5 + $0xc8] sm:$0xf]
    %v154 = vld [vmem:[#allocation5 + $0xcc] sm:$0xf]
    %v155 = vld [vmem:[#allocation5 + $0xd0] sm:$0xf]
    %v156 = vld [vmem:[#allocation5 + $0xd4] sm:$0xf]
    %v157 = vld [vmem:[#allocation5 + $0xd8] sm:$0xf]
    %v158 = vld [vmem:[#allocation5 + $0xdc] sm:$0xf]
    %v159 = vld [vmem:[#allocation5 + $0xe0] sm:$0xf]
    %v160 = vld [vmem:[#allocation5 + $0xe4] sm:$0xf]
    %v161 = vld [vmem:[#allocation5 + $0xe8] sm:$0xf]
    %v162 = vld [vmem:[#allocation5 + $0xec] sm:$0xf]
    %v163 = vld [vmem:[#allocation5 + $0xf0] sm:$0xf]
    %v164 = vld [vmem:[#allocation5 + $0xf4] sm:$0xf]
    %v165 = vld [vmem:[#allocation5 + $0xf8] sm:$0xf]
    %v166 = vld [vmem:[#allocation5 + $0xfc] sm:$0xf]
    %v167 = vld [vmem:[#allocation5 + $0x100] sm:$0xf]
    %v168 = vld [vmem:[#allocation5 + $0x104] sm:$0xf]
    %v169 = vld [vmem:[#allocation5 + $0x108] sm:$0xf]
    %v170 = vld [vmem:[#allocation5 + $0x10c] sm:$0xf]
    %v171 = vld [vmem:[#allocation5 + $0x110] sm:$0xf]
    %v172 = vld [vmem:[#allocation5 + $0x114] sm:$0xf]
    %v173 = vld [vmem:[#allocation5 + $0x118] sm:$0xf]
    %v174 = vld [vmem:[#allocation5 + $0x11c] sm:$0xf]
    %v175 = vld [vmem:[#allocation5 + $0x120] sm:$0xf]
    %v176 = vld [vmem:[#allocation5 + $0x124] sm:$0xf]
    %v177 = vld [vmem:[#allocation5 + $0x128] sm:$0xf]
    %v178 = vld [vmem:[#allocation5 + $0x12c] sm:$0xf]
    %v179 = vld [vmem:[#allocation5 + $0x130] sm:$0xf]
    %v180 = vld [vmem:[#allocation5 + $0x134] sm:$0xf]
    %v181 = vld [vmem:[#allocation5 + $0x138] sm:$0xf]
    %v182 = vld [vmem:[#allocation5 + $0x13c] sm:$0xf]
    %v183 = vld [vmem:[#allocation5 + $0x140] sm:$0xf]
    %v184 = vld [vmem:[#allocation5 + $0x144] sm:$0xf]
    %v185 = vld [vmem:[#allocation5 + $0x148] sm:$0xf]
    %v186 = vld [vmem:[#allocation5 + $0x14c] sm:$0xf]
    %v187 = vld [vmem:[#allocation5 + $0x150] sm:$0xf]
    %v188 = vld [vmem:[#allocation5 + $0x154] sm:$0xf]
    %v189 = vld [vmem:[#allocation5 + $0x158] sm:$0xf]
    %v190 = vld [vmem:[#allocation5 + $0x15c] sm:$0xf]
    %v191 = vld [vmem:[#allocation5 + $0x160] sm:$0xf]
    %v192 = vld [vmem:[#allocation5 + $0x164] sm:$0xf]
    %v193 = vld [vmem:[#allocation5 + $0x168] sm:$0xf]
    %v194 = vld [vmem:[#allocation5 + $0x16c] sm:$0xf]
    %v195 = vld [vmem:[#allocation5 + $0x170] sm:$0xf]
    %v196 = vld [vmem:[#allocation5 + $0x174] sm:$0xf]
    %v197 = vld [vmem:[#allocation5 + $0x178] sm:$0xf]
    %v198 = vld [vmem:[#allocation5 + $0x17c] sm:$0xf]
    %v199 = vld [vmem:[#allocation5 + $0x180] sm:$0xf]
    %v200 = vld [vmem:[#allocation5 + $0x184] sm:$0xf]
    %v201 = vld [vmem:[#allocation5 + $0x188] sm:$0xf]
    %v202 = vld [vmem:[#allocation5 + $0x18c] sm:$0xf]
    %v203 = vld [vmem:[#allocation5 + $0x190] sm:$0xf]
    %v204 = vld [vmem:[#allocation5 + $0x194] sm:$0xf]
    %v205 = vld [vmem:[#allocation5 + $0x198] sm:$0xf]
    %v206 = vld [vmem:[#allocation5 + $0x19c] sm:$0xf]
    %v207 = vld [vmem:[#allocation5 + $0x1a0] sm:$0xf]
    %v208 = vld [vmem:[#allocation5 + $0x1a4] sm:$0xf]
    %v209 = vld [vmem:[#allocation5 + $0x1a8] sm:$0xf]
    %v210 = vld [vmem:[#allocation5 + $0x1ac] sm:$0xf]
    %v211 = vld [vmem:[#allocation5 + $0x1b0] sm:$0xf]
    %v212 = vld [vmem:[#allocation5 + $0x1b4] sm:$0xf]
    %v213 = vld [vmem:[#allocation5 + $0x1b8] sm:$0xf]
    %v214 = vld [vmem:[#allocation5 + $0x1bc] sm:$0xf]
    %v215 = vld [vmem:[#allocation5 + $0x1c0] sm:$0xf]
    %v216 = vld [vmem:[#allocation5 + $0x1c4] sm:$0xf]
    %v217 = vld [vmem:[#allocation5 + $0x1c8] sm:$0xf]
    %v218 = vld [vmem:[#allocation5 + $0x1cc] sm:$0xf]
    %v219 = vld [vmem:[#allocation5 + $0x1d0] sm:$0xf]
    %v220 = vld [vmem:[#allocation5 + $0x1d4] sm:$0xf]
    %v221 = vld [vmem:[#allocation5 + $0x1d8] sm:$0xf]
    %v222 = vld [vmem:[#allocation5 + $0x1dc] sm:$0xf]
    %v223 = vld [vmem:[#allocation5 + $0x1e0] sm:$0xf]
    %v224 = vld [vmem:[#allocation5 + $0x1e4] sm:$0xf]
    %v225 = vld [vmem:[#allocation5 + $0x1e8] sm:$0xf]
    %v226 = vld [vmem:[#allocation5 + $0x1ec] sm:$0xf]
    %v227 = vld [vmem:[#allocation5 + $0x1f0] sm:$0xf]
    %v228 = vld [vmem:[#allocation5 + $0x1f4] sm:$0xf]
    %v229 = vld [vmem:[#allocation5 + $0x1f8] sm:$0xf]
    %v230 = vld [vmem:[#allocation5 + $0x1fc] sm:$0xf]
    %v231 = vld [vmem:[#allocation5 + $0x200] sm:$0xf]
    %v232 = vld [vmem:[#allocation5 + $0x204] sm:$0xf]
    %v233 = vld [vmem:[#allocation5 + $0x208] sm:$0xf]
    %v234 = vld [vmem:[#allocation5 + $0x20c] sm:$0xf]
    %v235 = vld [vmem:[#allocation5 + $0x210] sm:$0xf]
    %v236 = vld [vmem:[#allocation5 + $0x214] sm:$0xf]
    %v237 = vld [vmem:[#allocation5 + $0x218] sm:$0xf]
    %v238 = vld [vmem:[#allocation5 + $0x21c] sm:$0xf]
    %v239 = vld [vmem:[#allocation5 + $0x220] sm:$0xf]
    %v240 = vld [vmem:[#allocation5 + $0x224] sm:$0xf]
    %v241 = vld [vmem:[#allocation5 + $0x228] sm:$0xf]
    %v242 = vld [vmem:[#allocation5 + $0x22c] sm:$0xf]
    %v243 = vld [vmem:[#allocation5 + $0x230] sm:$0xf]
    %v244 = vld [vmem:[#allocation5 + $0x234] sm:$0xf]
    %v245 = vld [vmem:[#allocation5 + $0x238] sm:$0xf]
    %v246 = vld [vmem:[#allocation5 + $0x23c] sm:$0xf]
    %v247 = vld [vmem:[#allocation5 + $0x240] sm:$0xf]
    %v248 = vld [vmem:[#allocation5 + $0x244] sm:$0xf]
    %v249 = vld [vmem:[#allocation5 + $0x248] sm:$0xf]
    %v250 = vld [vmem:[#allocation5 + $0x24c] sm:$0xf]
    %v251 = vld [vmem:[#allocation5 + $0x250] sm:$0xf]
    %v252 = vld [vmem:[#allocation5 + $0x254] sm:$0xf]
    %v253 = vld [vmem:[#allocation5 + $0x258] sm:$0xf]
    %v254 = vld [vmem:[#allocation5 + $0x25c] sm:$0xf]
    %v255 = vld [vmem:[#allocation5 + $0x260] sm:$0xf]
    %v256 = vld [vmem:[#allocation5 + $0x264] sm:$0xf]
    %v257 = vld [vmem:[#allocation5 + $0x268] sm:$0xf]
    %v258 = vld [vmem:[#allocation5 + $0x26c] sm:$0xf]
    %v259 = vld [vmem:[#allocation5 + $0x270] sm:$0xf]
    %v260 = vld [vmem:[#allocation5 + $0x274] sm:$0xf]
    %v261 = vld [vmem:[#allocation5 + $0x278] sm:$0xf]
    %v262 = vld [vmem:[#allocation5 + $0x27c] sm:$0xf]
    %v263 = vld [vmem:[#allocation5 + $0x280] sm:$0xf]
    %v264 = vld [vmem:[#allocation5 + $0x284] sm:$0xf]
    %v265 = vld [vmem:[#allocation5 + $0x288] sm:$0xf]
    %v266 = vld [vmem:[#allocation5 + $0x28c] sm:$0xf]
    %v267 = vld [vmem:[#allocation5 + $0x290] sm:$0xf]
    %v268 = vld [vmem:[#allocation5 + $0x294] sm:$0xf]
    %v269 = vld [vmem:[#allocation5 + $0x298] sm:$0xf]
    %v270 = vld [vmem:[#allocation5 + $0x29c] sm:$0xf]
    %v271 = vld [vmem:[#allocation5 + $0x2a0] sm:$0xf]
    %v272 = vld [vmem:[#allocation5 + $0x2a4] sm:$0xf]
    %v273 = vld [vmem:[#allocation5 + $0x2a8] sm:$0xf]
    %v274 = vld [vmem:[#allocation5 + $0x2ac] sm:$0xf]
    %v275 = vld [vmem:[#allocation5 + $0x2b0] sm:$0xf]
    %v276 = vld [vmem:[#allocation5 + $0x2b4] sm:$0xf]
    %v277 = vld [vmem:[#allocation5 + $0x2b8] sm:$0xf]
    %v278 = vld [vmem:[#allocation5 + $0x2bc] sm:$0xf]
    %v279 = vld [vmem:[#allocation5 + $0x2c0] sm:$0xf]
    %v280 = vld [vmem:[#allocation5 + $0x2c4] sm:$0xf]
    %v281 = vld [vmem:[#allocation5 + $0x2c8] sm:$0xf]
    %v282 = vld [vmem:[#allocation5 + $0x2cc] sm:$0xf]
    %v283 = vld [vmem:[#allocation5 + $0x2d0] sm:$0xf]
    %v284 = vld [vmem:[#allocation5 + $0x2d4] sm:$0xf]
    %v285 = vld [vmem:[#allocation5 + $0x2d8] sm:$0xf]
    %v286 = vld [vmem:[#allocation5 + $0x2dc] sm:$0xf]
    %v287 = vld [vmem:[#allocation5 + $0x2e0] sm:$0xf]
    %v288 = vld [vmem:[#allocation5 + $0x2e4] sm:$0xf]
    %v289 = vld [vmem:[#allocation5 + $0x2e8] sm:$0xf]
    %v290 = vld [vmem:[#allocation5 + $0x2ec] sm:$0xf]
    %v291 = vld [vmem:[#allocation5 + $0x2f0] sm:$0xf]
    %v292 = vld [vmem:[#allocation5 + $0x2f4] sm:$0xf]
    %v293 = vld [vmem:[#allocation5 + $0x2f8] sm:$0xf]
    %v294 = vld [vmem:[#allocation5 + $0x2fc] sm:$0xf]
    %v295 = vld [vmem:[#allocation5 + $0x300] sm:$0xf]
    %v296 = vld [vmem:[#allocation5 + $0x304] sm:$0xf]
    %v297 = vld [vmem:[#allocation5 + $0x308] sm:$0xf]
    %v298 = vld [vmem:[#allocation5 + $0x30c] sm:$0xf]
    %v299 = vld [vmem:[#allocation5 + $0x310] sm:$0xf]
    %v300 = vld [vmem:[#allocation5 + $0x314] sm:$0xf]
    %v301 = vld [vmem:[#allocation5 + $0x318] sm:$0xf]
    %v302 = vld [vmem:[#allocation5 + $0x31c] sm:$0xf]
    %v303 = vld [vmem:[#allocation5 + $0x320] sm:$0xf]
    %v304 = vld [vmem:[#allocation5 + $0x324] sm:$0xf]
    %v305 = vld [vmem:[#allocation5 + $0x328] sm:$0xf]
    %v306 = vld [vmem:[#allocation5 + $0x32c] sm:$0xf]
    %v307 = vld [vmem:[#allocation5 + $0x330] sm:$0xf]
    %v308 = vld [vmem:[#allocation5 + $0x334] sm:$0xf]
    %v309 = vld [vmem:[#allocation5 + $0x338] sm:$0xf]
    %v310 = vld [vmem:[#allocation5 + $0x33c] sm:$0xf]
    %v311 = vld [vmem:[#allocation5 + $0x340] sm:$0xf]
    %v312 = vld [vmem:[#allocation5 + $0x344] sm:$0xf]
    %v313 = vld [vmem:[#allocation5 + $0x348] sm:$0xf]
    %v314 = vld [vmem:[#allocation5 + $0x34c] sm:$0xf]
    %v315 = vld [vmem:[#allocation5 + $0x350] sm:$0xf]
    %v316 = vld [vmem:[#allocation5 + $0x354] sm:$0xf]
    %v317 = vld [vmem:[#allocation5 + $0x358] sm:$0xf]
    %v318 = vld [vmem:[#allocation5 + $0x35c] sm:$0xf]
    %v319 = vld [vmem:[#allocation5 + $0x360] sm:$0xf]
    %v320 = vld [vmem:[#allocation5 + $0x364] sm:$0xf]
    %v321 = vld [vmem:[#allocation5 + $0x368] sm:$0xf]
    %v322 = vld [vmem:[#allocation5 + $0x36c] sm:$0xf]
    %v323 = vld [vmem:[#allocation5 + $0x370] sm:$0xf]
    %v324 = vld [vmem:[#allocation5 + $0x374] sm:$0xf]
    %v325 = vld [vmem:[#allocation5 + $0x378] sm:$0xf]
    %v326 = vld [vmem:[#allocation5 + $0x37c] sm:$0xf]
    %v327 = vld [vmem:[#allocation5 + $0x380] sm:$0xf]
    %v328 = vld [vmem:[#allocation5 + $0x384] sm:$0xf]
    %v329 = vld [vmem:[#allocation5 + $0x388] sm:$0xf]
    %v330 = vld [vmem:[#allocation5 + $0x38c] sm:$0xf]
    %v331 = vld [vmem:[#allocation5 + $0x390] sm:$0xf]
    %v332 = vld [vmem:[#allocation5 + $0x394] sm:$0xf]
    %v333 = vld [vmem:[#allocation5 + $0x398] sm:$0xf]
    %v334 = vld [vmem:[#allocation5 + $0x39c] sm:$0xf]
    %v335 = vld [vmem:[#allocation5 + $0x3a0] sm:$0xf]
    %v336 = vld [vmem:[#allocation5 + $0x3a4] sm:$0xf]
    %v337 = vld [vmem:[#allocation5 + $0x3a8] sm:$0xf]
    %v338 = vld [vmem:[#allocation5 + $0x3ac] sm:$0xf]
    %v339 = vld [vmem:[#allocation5 + $0x3b0] sm:$0xf]
    %v340 = vld [vmem:[#allocation5 + $0x3b4] sm:$0xf]
    %v341 = vld [vmem:[#allocation5 + $0x3b8] sm:$0xf]
    %v342 = vld [vmem:[#allocation5 + $0x3bc] sm:$0xf]
    %v343 = vld [vmem:[#allocation5 + $0x3c0] sm:$0xf]
    %v344 = vld [vmem:[#allocation5 + $0x3c4] sm:$0xf]
    %v345 = vld [vmem:[#allocation5 + $0x3c8] sm:$0xf]
    %v346 = vld [vmem:[#allocation5 + $0x3cc] sm:$0xf]
    %v347 = vld [vmem:[#allocation5 + $0x3d0] sm:$0xf]
    %v348 = vld [vmem:[#allocation5 + $0x3d4] sm:$0xf]
    %v349 = vld [vmem:[#allocation5 + $0x3d8] sm:$0xf]
    %v350 = vld [vmem:[#allocation5 + $0x3dc] sm:$0xf]
    %v351 = vld [vmem:[#allocation5 + $0x3e0] sm:$0xf]
    %v352 = vld [vmem:[#allocation5 + $0x3e4] sm:$0xf]
    %v353 = vld [vmem:[#allocation5 + $0x3e8] sm:$0xf]
    %v354 = vld [vmem:[#allocation5 + $0x3ec] sm:$0xf]
    %v355 = vld [vmem:[#allocation5 + $0x3f0] sm:$0xf]
    %v356 = vld [vmem:[#allocation5 + $0x3f4] sm:$0xf]
    %v357 = vld [vmem:[#allocation5 + $0x3f8] sm:$0xf]
    %v358 = vld [vmem:[#allocation5 + $0x3fc] sm:$0xf]
    %v615 = vunpack.c.l.b16 %v103
    %v616 = vunpack.c.l.b16 %v104
    %v617 = vunpack.c.l.b16 %v105
    %v618 = vunpack.c.l.b16 %v106
    %v619 = vunpack.c.l.b16 %v107
    %v620 = vunpack.c.l.b16 %v108
    %v621 = vunpack.c.l.b16 %v109
    %v622 = vunpack.c.l.b16 %v110
    %v623 = vunpack.c.l.b16 %v111
    %v624 = vunpack.c.l.b16 %v112
    %v625 = vunpack.c.l.b16 %v113
    %v626 = vunpack.c.l.b16 %v114
    %v627 = vunpack.c.l.b16 %v115
    %v628 = vunpack.c.l.b16 %v116
    %v629 = vunpack.c.l.b16 %v117
    %v630 = vunpack.c.l.b16 %v118
    %v631 = vunpack.c.l.b16 %v119
    %v632 = vunpack.c.l.b16 %v120
    %v633 = vunpack.c.l.b16 %v121
    %v634 = vunpack.c.l.b16 %v122
    %v635 = vunpack.c.l.b16 %v123
    %v636 = vunpack.c.l.b16 %v124
    %v637 = vunpack.c.l.b16 %v125
    %v638 = vunpack.c.l.b16 %v126
    %v639 = vunpack.c.l.b16 %v127
    %v640 = vunpack.c.l.b16 %v128
    %v641 = vunpack.c.l.b16 %v129
    %v642 = vunpack.c.l.b16 %v130
    %v643 = vunpack.c.l.b16 %v131
    %v644 = vunpack.c.l.b16 %v132
    %v645 = vunpack.c.l.b16 %v133
    %v646 = vunpack.c.l.b16 %v134
    %v647 = vunpack.c.l.b16 %v135
    %v648 = vunpack.c.l.b16 %v136
    %v649 = vunpack.c.l.b16 %v137
    %v650 = vunpack.c.l.b16 %v138
    %v651 = vunpack.c.l.b16 %v139
    %v652 = vunpack.c.l.b16 %v140
    %v653 = vunpack.c.l.b16 %v141
    %v654 = vunpack.c.l.b16 %v142
    %v655 = vunpack.c.l.b16 %v143
    %v656 = vunpack.c.l.b16 %v144
    %v657 = vunpack.c.l.b16 %v145
    %v658 = vunpack.c.l.b16 %v146
    %v659 = vunpack.c.l.b16 %v147
    %v660 = vunpack.c.l.b16 %v148
    %v661 = vunpack.c.l.b16 %v149
    %v662 = vunpack.c.l.b16 %v150
    %v663 = vunpack.c.l.b16 %v151
    %v664 = vunpack.c.l.b16 %v152
    %v665 = vunpack.c.l.b16 %v153
    %v666 = vunpack.c.l.b16 %v154
    %v667 = vunpack.c.l.b16 %v155
    %v668 = vunpack.c.l.b16 %v156
    %v669 = vunpack.c.l.b16 %v157
    %v670 = vunpack.c.l.b16 %v158
    %v671 = vunpack.c.l.b16 %v159
    %v672 = vunpack.c.l.b16 %v160
    %v673 = vunpack.c.l.b16 %v161
    %v674 = vunpack.c.l.b16 %v162
    %v675 = vunpack.c.l.b16 %v163
    %v676 = vunpack.c.l.b16 %v164
    %v677 = vunpack.c.l.b16 %v165
    %v678 = vunpack.c.l.b16 %v166
    %v679 = vunpack.c.l.b16 %v167
    %v680 = vunpack.c.l.b16 %v168
    %v681 = vunpack.c.l.b16 %v169
    %v682 = vunpack.c.l.b16 %v170
    %v683 = vunpack.c.l.b16 %v171
    %v684 = vunpack.c.l.b16 %v172
    %v685 = vunpack.c.l.b16 %v173
    %v686 = vunpack.c.l.b16 %v174
    %v687 = vunpack.c.l.b16 %v175
    %v688 = vunpack.c.l.b16 %v176
    %v689 = vunpack.c.l.b16 %v177
    %v690 = vunpack.c.l.b16 %v178
    %v691 = vunpack.c.l.b16 %v179
    %v692 = vunpack.c.l.b16 %v180
    %v693 = vunpack.c.l.b16 %v181
    %v694 = vunpack.c.l.b16 %v182
    %v695 = vunpack.c.l.b16 %v183
    %v696 = vunpack.c.l.b16 %v184
    %v697 = vunpack.c.l.b16 %v185
    %v698 = vunpack.c.l.b16 %v186
    %v699 = vunpack.c.l.b16 %v187
    %v700 = vunpack.c.l.b16 %v188
    %v701 = vunpack.c.l.b16 %v189
    %v702 = vunpack.c.l.b16 %v190
    %v703 = vunpack.c.l.b16 %v191
    %v704 = vunpack.c.l.b16 %v192
    %v705 = vunpack.c.l.b16 %v193
    %v706 = vunpack.c.l.b16 %v194
    %v707 = vunpack.c.l.b16 %v195
    %v708 = vunpack.c.l.b16 %v196
    %v709 = vunpack.c.l.b16 %v197
    %v710 = vunpack.c.l.b16 %v198
    %v711 = vunpack.c.l.b16 %v199
    %v712 = vunpack.c.l.b16 %v200
    %v713 = vunpack.c.l.b16 %v201
    %v714 = vunpack.c.l.b16 %v202
    %v715 = vunpack.c.l.b16 %v203
    %v716 = vunpack.c.l.b16 %v204
    %v717 = vunpack.c.l.b16 %v205
    %v718 = vunpack.c.l.b16 %v206
    %v719 = vunpack.c.l.b16 %v207
    %v720 = vunpack.c.l.b16 %v208
    %v721 = vunpack.c.l.b16 %v209
    %v722 = vunpack.c.l.b16 %v210
    %v723 = vunpack.c.l.b16 %v211
    %v724 = vunpack.c.l.b16 %v212
    %v725 = vunpack.c.l.b16 %v213
    %v726 = vunpack.c.l.b16 %v214
    %v727 = vunpack.c.l.b16 %v215
    %v728 = vunpack.c.l.b16 %v216
    %v729 = vunpack.c.l.b16 %v217
    %v730 = vunpack.c.l.b16 %v218
    %v731 = vunpack.c.l.b16 %v219
    %v732 = vunpack.c.l.b16 %v220
    %v733 = vunpack.c.l.b16 %v221
    %v734 = vunpack.c.l.b16 %v222
    %v735 = vunpack.c.l.b16 %v223
    %v736 = vunpack.c.l.b16 %v224
    %v737 = vunpack.c.l.b16 %v225
    %v738 = vunpack.c.l.b16 %v226
    %v739 = vunpack.c.l.b16 %v227
    %v740 = vunpack.c.l.b16 %v228
    %v741 = vunpack.c.l.b16 %v229
    %v742 = vunpack.c.l.b16 %v230
    %v743 = vunpack.c.l.b16 %v231
    %v744 = vunpack.c.l.b16 %v232
    %v745 = vunpack.c.l.b16 %v233
    %v746 = vunpack.c.l.b16 %v234
    %v747 = vunpack.c.l.b16 %v235
    %v748 = vunpack.c.l.b16 %v236
    %v749 = vunpack.c.l.b16 %v237
    %v750 = vunpack.c.l.b16 %v238
    %v751 = vunpack.c.l.b16 %v239
    %v752 = vunpack.c.l.b16 %v240
    %v753 = vunpack.c.l.b16 %v241
    %v754 = vunpack.c.l.b16 %v242
    %v755 = vunpack.c.l.b16 %v243
    %v756 = vunpack.c.l.b16 %v244
    %v757 = vunpack.c.l.b16 %v245
    %v758 = vunpack.c.l.b16 %v246
    %v759 = vunpack.c.l.b16 %v247
    %v760 = vunpack.c.l.b16 %v248
    %v761 = vunpack.c.l.b16 %v249
    %v762 = vunpack.c.l.b16 %v250
    %v763 = vunpack.c.l.b16 %v251
    %v764 = vunpack.c.l.b16 %v252
    %v765 = vunpack.c.l.b16 %v253
    %v766 = vunpack.c.l.b16 %v254
    %v767 = vunpack.c.l.b16 %v255
    %v768 = vunpack.c.l.b16 %v256
    %v769 = vunpack.c.l.b16 %v257
    %v770 = vunpack.c.l.b16 %v258
    %v771 = vunpack.c.l.b16 %v259
    %v772 = vunpack.c.l.b16 %v260
    %v773 = vunpack.c.l.b16 %v261
    %v774 = vunpack.c.l.b16 %v262
    %v775 = vunpack.c.l.b16 %v263
    %v776 = vunpack.c.l.b16 %v264
    %v777 = vunpack.c.l.b16 %v265
    %v778 = vunpack.c.l.b16 %v266
    %v779 = vunpack.c.l.b16 %v267
    %v780 = vunpack.c.l.b16 %v268
    %v781 = vunpack.c.l.b16 %v269
    %v782 = vunpack.c.l.b16 %v270
    %v783 = vunpack.c.l.b16 %v271
    %v784 = vunpack.c.l.b16 %v272
    %v785 = vunpack.c.l.b16 %v273
    %v786 = vunpack.c.l.b16 %v274
    %v787 = vunpack.c.l.b16 %v275
    %v788 = vunpack.c.l.b16 %v276
    %v789 = vunpack.c.l.b16 %v277
    %v790 = vunpack.c.l.b16 %v278
    %v791 = vunpack.c.l.b16 %v279
    %v792 = vunpack.c.l.b16 %v280
    %v793 = vunpack.c.l.b16 %v281
    %v794 = vunpack.c.l.b16 %v282
    %v795 = vunpack.c.l.b16 %v283
    %v796 = vunpack.c.l.b16 %v284
    %v797 = vunpack.c.l.b16 %v285
    %v798 = vunpack.c.l.b16 %v286
    %v799 = vunpack.c.l.b16 %v287
    %v800 = vunpack.c.l.b16 %v288
    %v801 = vunpack.c.l.b16 %v289
    %v802 = vunpack.c.l.b16 %v290
    %v803 = vunpack.c.l.b16 %v291
    %v804 = vunpack.c.l.b16 %v292
    %v805 = vunpack.c.l.b16 %v293
    %v806 = vunpack.c.l.b16 %v294
    %v807 = vunpack.c.l.b16 %v295
    %v808 = vunpack.c.l.b16 %v296
    %v809 = vunpack.c.l.b16 %v297
    %v810 = vunpack.c.l.b16 %v298
    %v811 = vunpack.c.l.b16 %v299
    %v812 = vunpack.c.l.b16 %v300
    %v813 = vunpack.c.l.b16 %v301
    %v814 = vunpack.c.l.b16 %v302
    %v815 = vunpack.c.l.b16 %v303
    %v816 = vunpack.c.l.b16 %v304
    %v817 = vunpack.c.l.b16 %v305
    %v818 = vunpack.c.l.b16 %v306
    %v819 = vunpack.c.l.b16 %v307
    %v820 = vunpack.c.l.b16 %v308
    %v821 = vunpack.c.l.b16 %v309
    %v822 = vunpack.c.l.b16 %v310
    %v823 = vunpack.c.l.b16 %v311
    %v824 = vunpack.c.l.b16 %v312
    %v825 = vunpack.c.l.b16 %v313
    %v826 = vunpack.c.l.b16 %v314
    %v827 = vunpack.c.l.b16 %v315
    %v828 = vunpack.c.l.b16 %v316
    %v829 = vunpack.c.l.b16 %v317
    %v830 = vunpack.c.l.b16 %v318
    %v831 = vunpack.c.l.b16 %v319
    %v832 = vunpack.c.l.b16 %v320
    %v833 = vunpack.c.l.b16 %v321
    %v834 = vunpack.c.l.b16 %v322
    %v835 = vunpack.c.l.b16 %v323
    %v836 = vunpack.c.l.b16 %v324
    %v837 = vunpack.c.l.b16 %v325
    %v838 = vunpack.c.l.b16 %v326
    %v839 = vunpack.c.l.b16 %v327
    %v840 = vunpack.c.l.b16 %v328
    %v841 = vunpack.c.l.b16 %v329
    %v842 = vunpack.c.l.b16 %v330
    %v843 = vunpack.c.l.b16 %v331
    %v844 = vunpack.c.l.b16 %v332
    %v845 = vunpack.c.l.b16 %v333
    %v846 = vunpack.c.l.b16 %v334
    %v847 = vunpack.c.l.b16 %v335
    %v848 = vunpack.c.l.b16 %v336
    %v849 = vunpack.c.l.b16 %v337
    %v850 = vunpack.c.l.b16 %v338
    %v851 = vunpack.c.l.b16 %v339
    %v852 = vunpack.c.l.b16 %v340
    %v853 = vunpack.c.l.b16 %v341
    %v854 = vunpack.c.l.b16 %v342
    %v855 = vunpack.c.l.b16 %v343
    %v856 = vunpack.c.l.b16 %v344
    %v857 = vunpack.c.l.b16 %v345
    %v858 = vunpack.c.l.b16 %v346
    %v859 = vunpack.c.l.b16 %v347
    %v860 = vunpack.c.l.b16 %v348
    %v861 = vunpack.c.l.b16 %v349
    %v862 = vunpack.c.l.b16 %v350
    %v863 = vunpack.c.l.b16 %v351
    %v864 = vunpack.c.l.b16 %v352
    %v865 = vunpack.c.l.b16 %v353
    %v866 = vunpack.c.l.b16 %v354
    %v867 = vunpack.c.l.b16 %v355
    %v868 = vunpack.c.l.b16 %v356
    %v869 = vunpack.c.l.b16 %v357
    %v870 = vunpack.c.l.b16 %v358
    %v871 = vpack.c.b16 %v616, %v615
    %v872 = vpack.c.b16 %v618, %v617
    %v873 = vpack.c.b16 %v620, %v619
    %v874 = vpack.c.b16 %v622, %v621
    %v875 = vpack.c.b16 %v624, %v623
    %v876 = vpack.c.b16 %v626, %v625
    %v877 = vpack.c.b16 %v628, %v627
    %v878 = vpack.c.b16 %v630, %v629
    %v879 = vpack.c.b16 %v632, %v631
    %v880 = vpack.c.b16 %v634, %v633
    %v881 = vpack.c.b16 %v636, %v635
    %v882 = vpack.c.b16 %v638, %v637
    %v883 = vpack.c.b16 %v640, %v639
    %v884 = vpack.c.b16 %v642, %v641
    %v885 = vpack.c.b16 %v644, %v643
    %v886 = vpack.c.b16 %v646, %v645
    %v887 = vpack.c.b16 %v648, %v647
    %v888 = vpack.c.b16 %v650, %v649
    %v889 = vpack.c.b16 %v652, %v651
    %v890 = vpack.c.b16 %v654, %v653
    %v891 = vpack.c.b16 %v656, %v655
    %v892 = vpack.c.b16 %v658, %v657
    %v893 = vpack.c.b16 %v660, %v659
    %v894 = vpack.c.b16 %v662, %v661
    %v895 = vpack.c.b16 %v664, %v663
    %v896 = vpack.c.b16 %v666, %v665
    %v897 = vpack.c.b16 %v668, %v667
    %v898 = vpack.c.b16 %v670, %v669
    %v899 = vpack.c.b16 %v672, %v671
    %v900 = vpack.c.b16 %v674, %v673
    %v901 = vpack.c.b16 %v676, %v675
    %v902 = vpack.c.b16 %v678, %v677
    %v903 = vpack.c.b16 %v680, %v679
    %v904 = vpack.c.b16 %v682, %v681
    %v905 = vpack.c.b16 %v684, %v683
    %v906 = vpack.c.b16 %v686, %v685
    %v907 = vpack.c.b16 %v688, %v687
    %v908 = vpack.c.b16 %v690, %v689
    %v909 = vpack.c.b16 %v692, %v691
    %v910 = vpack.c.b16 %v694, %v693
    %v911 = vpack.c.b16 %v696, %v695
    %v912 = vpack.c.b16 %v698, %v697
    %v913 = vpack.c.b16 %v700, %v699
    %v914 = vpack.c.b16 %v702, %v701
    %v915 = vpack.c.b16 %v704, %v703
    %v916 = vpack.c.b16 %v706, %v705
    %v917 = vpack.c.b16 %v708, %v707
    %v918 = vpack.c.b16 %v710, %v709
    %v919 = vpack.c.b16 %v712, %v711
    %v920 = vpack.c.b16 %v714, %v713
    %v921 = vpack.c.b16 %v716, %v715
    %v922 = vpack.c.b16 %v718, %v717
    %v923 = vpack.c.b16 %v720, %v719
    %v924 = vpack.c.b16 %v722, %v721
    %v925 = vpack.c.b16 %v724, %v723
    %v926 = vpack.c.b16 %v726, %v725
    %v927 = vpack.c.b16 %v728, %v727
    %v928 = vpack.c.b16 %v730, %v729
    %v929 = vpack.c.b16 %v732, %v731
    %v930 = vpack.c.b16 %v734, %v733
    %v931 = vpack.c.b16 %v736, %v735
    %v932 = vpack.c.b16 %v738, %v737
    %v933 = vpack.c.b16 %v740, %v739
    %v934 = vpack.c.b16 %v742, %v741
    %v935 = vpack.c.b16 %v744, %v743
    %v936 = vpack.c.b16 %v746, %v745
    %v937 = vpack.c.b16 %v748, %v747
    %v938 = vpack.c.b16 %v750, %v749
    %v939 = vpack.c.b16 %v752, %v751
    %v940 = vpack.c.b16 %v754, %v753
    %v941 = vpack.c.b16 %v756, %v755
    %v942 = vpack.c.b16 %v758, %v757
    %v943 = vpack.c.b16 %v760, %v759
    %v944 = vpack.c.b16 %v762, %v761
    %v945 = vpack.c.b16 %v764, %v763
    %v946 = vpack.c.b16 %v766, %v765
    %v947 = vpack.c.b16 %v768, %v767
    %v948 = vpack.c.b16 %v770, %v769
    %v949 = vpack.c.b16 %v772, %v771
    %v950 = vpack.c.b16 %v774, %v773
    %v951 = vpack.c.b16 %v776, %v775
    %v952 = vpack.c.b16 %v778, %v777
    %v953 = vpack.c.b16 %v780, %v779
    %v954 = vpack.c.b16 %v782, %v781
    %v955 = vpack.c.b16 %v784, %v783
    %v956 = vpack.c.b16 %v786, %v785
    %v957 = vpack.c.b16 %v788, %v787
    %v958 = vpack.c.b16 %v790, %v789
    %v959 = vpack.c.b16 %v792, %v791
    %v960 = vpack.c.b16 %v794, %v793
    %v961 = vpack.c.b16 %v796, %v795
    %v962 = vpack.c.b16 %v798, %v797
    %v963 = vpack.c.b16 %v800, %v799
    %v964 = vpack.c.b16 %v802, %v801
    %v965 = vpack.c.b16 %v804, %v803
    %v966 = vpack.c.b16 %v806, %v805
    %v967 = vpack.c.b16 %v808, %v807
    %v968 = vpack.c.b16 %v810, %v809
    %v969 = vpack.c.b16 %v812, %v811
    %v970 = vpack.c.b16 %v814, %v813
    %v971 = vpack.c.b16 %v816, %v815
    %v972 = vpack.c.b16 %v818, %v817
    %v973 = vpack.c.b16 %v820, %v819
    %v974 = vpack.c.b16 %v822, %v821
    %v975 = vpack.c.b16 %v824, %v823
    %v976 = vpack.c.b16 %v826, %v825
    %v977 = vpack.c.b16 %v828, %v827
    %v978 = vpack.c.b16 %v830, %v829
    %v979 = vpack.c.b16 %v832, %v831
    %v980 = vpack.c.b16 %v834, %v833
    %v981 = vpack.c.b16 %v836, %v835
    %v982 = vpack.c.b16 %v838, %v837
    %v983 = vpack.c.b16 %v840, %v839
    %v984 = vpack.c.b16 %v842, %v841
    %v985 = vpack.c.b16 %v844, %v843
    %v986 = vpack.c.b16 %v846, %v845
    %v987 = vpack.c.b16 %v848, %v847
    %v988 = vpack.c.b16 %v850, %v849
    %v989 = vpack.c.b16 %v852, %v851
    %v990 = vpack.c.b16 %v854, %v853
    %v991 = vpack.c.b16 %v856, %v855
    %v992 = vpack.c.b16 %v858, %v857
    %v993 = vpack.c.b16 %v860, %v859
    %v994 = vpack.c.b16 %v862, %v861
    %v995 = vpack.c.b16 %v864, %v863
    %v996 = vpack.c.b16 %v866, %v865
    %v997 = vpack.c.b16 %v868, %v867
    %v998 = vpack.c.b16 %v870, %v869
    %1127 = vmatpush.bf16.msra.mxu0 %v878
    %1128 = vmatpush.bf16.msra.mxu0 %v877
    %1129 = vmatpush.bf16.msra.mxu0 %v876
    %1130 = vmatpush.bf16.msra.mxu0 %v875
    %1131 = vmatpush.bf16.msra.mxu0 %v874
    %1132 = vmatpush.bf16.msra.mxu0 %v873
    %1133 = vmatpush.bf16.msra.mxu0 %v872
    %1134 = vmatpush.bf16.msra.mxu0 %v871
    %1135 = vmatmul.bf16.gmra.mxu0 %v87
    %v1136 = vpop.f32.mrf.mxu0
    %v1137 = vadd.f32 0.0, %v1136
    %v1138 = vpop.f32.mrf.mxu0
    %1139 = vdwg.mxu0
    %1140 = vmatpush.bf16.msra.mxu0 %v886
    %1141 = vmatpush.bf16.msra.mxu0 %v885
    %1142 = vmatpush.bf16.msra.mxu0 %v884
    %1143 = vmatpush.bf16.msra.mxu0 %v883
    %1144 = vmatpush.bf16.msra.mxu0 %v882
    %1145 = vmatpush.bf16.msra.mxu0 %v881
    %1146 = vmatpush.bf16.msra.mxu0 %v880
    %1147 = vmatpush.bf16.msra.mxu0 %v879
    %1148 = vmatmul.bf16.gmra.mxu0 %v88
    %v1149 = vpop.f32.mrf.mxu0
    %v1150 = vadd.f32 %v1137, %v1149
    %v1151 = vpop.f32.mrf.mxu0
    %1152 = vdwg.mxu0
    %1153 = vmatpush.bf16.msra.mxu0 %v894
    %1154 = vmatpush.bf16.msra.mxu0 %v893
    %1155 = vmatpush.bf16.msra.mxu0 %v892
    %1156 = vmatpush.bf16.msra.mxu0 %v891
    %1157 = vmatpush.bf16.msra.mxu0 %v890
    %1158 = vmatpush.bf16.msra.mxu0 %v889
    %1159 = vmatpush.bf16.msra.mxu0 %v888
    %1160 = vmatpush.bf16.msra.mxu0 %v887
    %1161 = vmatmul.bf16.gmra.mxu0 %v89
    %v1162 = vpop.f32.mrf.mxu0
    %v1163 = vadd.f32 %v1150, %v1162
    %v1164 = vpop.f32.mrf.mxu0
    %1165 = vdwg.mxu0
    %1166 = vmatpush.bf16.msra.mxu0 %v902
    %1167 = vmatpush.bf16.msra.mxu0 %v901
    %1168 = vmatpush.bf16.msra.mxu0 %v900
    %1169 = vmatpush.bf16.msra.mxu0 %v899
    %1170 = vmatpush.bf16.msra.mxu0 %v898
    %1171 = vmatpush.bf16.msra.mxu0 %v897
    %1172 = vmatpush.bf16.msra.mxu0 %v896
    %1173 = vmatpush.bf16.msra.mxu0 %v895
    %1174 = vmatmul.bf16.gmra.mxu0 %v90
    %v1175 = vpop.f32.mrf.mxu0
    %v1176 = vadd.f32 %v1163, %v1175
    %v1177 = vpop.f32.mrf.mxu0
    %1178 = vdwg.mxu0
    %1179 = vmatpush.bf16.msra.mxu0 %v910
    %1180 = vmatpush.bf16.msra.mxu0 %v909
    %1181 = vmatpush.bf16.msra.mxu0 %v908
    %1182 = vmatpush.bf16.msra.mxu0 %v907
    %1183 = vmatpush.bf16.msra.mxu0 %v906
    %1184 = vmatpush.bf16.msra.mxu0 %v905
    %1185 = vmatpush.bf16.msra.mxu0 %v904
    %1186 = vmatpush.bf16.msra.mxu0 %v903
    %1187 = vmatmul.bf16.gmra.mxu0 %v91
    %v1188 = vpop.f32.mrf.mxu0
    %v1189 = vadd.f32 %v1176, %v1188
    %v1190 = vpop.f32.mrf.mxu0
    %1191 = vdwg.mxu0
    %1192 = vmatpush.bf16.msra.mxu0 %v918
    %1193 = vmatpush.bf16.msra.mxu0 %v917
    %1194 = vmatpush.bf16.msra.mxu0 %v916
    %1195 = vmatpush.bf16.msra.mxu0 %v915
    %1196 = vmatpush.bf16.msra.mxu0 %v914
    %1197 = vmatpush.bf16.msra.mxu0 %v913
    %1198 = vmatpush.bf16.msra.mxu0 %v912
    %1199 = vmatpush.bf16.msra.mxu0 %v911
    %1200 = vmatmul.bf16.gmra.mxu0 %v92
    %v1201 = vpop.f32.mrf.mxu0
    %v1202 = vadd.f32 %v1189, %v1201
    %v1203 = vpop.f32.mrf.mxu0
    %1204 = vdwg.mxu0
    %1205 = vmatpush.bf16.msra.mxu0 %v926
    %1206 = vmatpush.bf16.msra.mxu0 %v925
    %1207 = vmatpush.bf16.msra.mxu0 %v924
    %1208 = vmatpush.bf16.msra.mxu0 %v923
    %1209 = vmatpush.bf16.msra.mxu0 %v922
    %1210 = vmatpush.bf16.msra.mxu0 %v921
    %1211 = vmatpush.bf16.msra.mxu0 %v920
    %1212 = vmatpush.bf16.msra.mxu0 %v919
    %1213 = vmatmul.bf16.gmra.mxu0 %v93
    %v1214 = vpop.f32.mrf.mxu0
    %v1215 = vadd.f32 %v1202, %v1214
    %v1216 = vpop.f32.mrf.mxu0
    %1217 = vdwg.mxu0
    %1218 = vmatpush.bf16.msra.mxu0 %v934
    %1219 = vmatpush.bf16.msra.mxu0 %v933
    %1220 = vmatpush.bf16.msra.mxu0 %v932
    %1221 = vmatpush.bf16.msra.mxu0 %v931
    %1222 = vmatpush.bf16.msra.mxu0 %v930
    %1223 = vmatpush.bf16.msra.mxu0 %v929
    %1224 = vmatpush.bf16.msra.mxu0 %v928
    %1225 = vmatpush.bf16.msra.mxu0 %v927
    %1226 = vmatmul.bf16.gmra.mxu0 %v94
    %v1227 = vpop.f32.mrf.mxu0
    %v1228 = vadd.f32 %v1215, %v1227
    %v1229 = vpop.f32.mrf.mxu0
    %1230 = vdwg.mxu0
    %1231 = vmatpush.bf16.msra.mxu0 %v942
    %1232 = vmatpush.bf16.msra.mxu0 %v941
    %1233 = vmatpush.bf16.msra.mxu0 %v940
    %1234 = vmatpush.bf16.msra.mxu0 %v939
    %1235 = vmatpush.bf16.msra.mxu0 %v938
    %1236 = vmatpush.bf16.msra.mxu0 %v937
    %1237 = vmatpush.bf16.msra.mxu0 %v936
    %1238 = vmatpush.bf16.msra.mxu0 %v935
    %1239 = vmatmul.bf16.gmra.mxu0 %v95
    %v1240 = vpop.f32.mrf.mxu0
    %v1241 = vadd.f32 %v1228, %v1240
    %v1242 = vpop.f32.mrf.mxu0
    %1243 = vdwg.mxu0
    %1244 = vmatpush.bf16.msra.mxu0 %v950
    %1245 = vmatpush.bf16.msra.mxu0 %v949
    %1246 = vmatpush.bf16.msra.mxu0 %v948
    %1247 = vmatpush.bf16.msra.mxu0 %v947
    %1248 = vmatpush.bf16.msra.mxu0 %v946
    %1249 = vmatpush.bf16.msra.mxu0 %v945
    %1250 = vmatpush.bf16.msra.mxu0 %v944
    %1251 = vmatpush.bf16.msra.mxu0 %v943
    %1252 = vmatmul.bf16.gmra.mxu0 %v96
    %v1253 = vpop.f32.mrf.mxu0
    %v1254 = vadd.f32 %v1241, %v1253
    %v1255 = vpop.f32.mrf.mxu0
    %1256 = vdwg.mxu0
    %1257 = vmatpush.bf16.msra.mxu0 %v958
    %1258 = vmatpush.bf16.msra.mxu0 %v957
    %1259 = vmatpush.bf16.msra.mxu0 %v956
    %1260 = vmatpush.bf16.msra.mxu0 %v955
    %1261 = vmatpush.bf16.msra.mxu0 %v954
    %1262 = vmatpush.bf16.msra.mxu0 %v953
    %1263 = vmatpush.bf16.msra.mxu0 %v952
    %1264 = vmatpush.bf16.msra.mxu0 %v951
    %1265 = vmatmul.bf16.gmra.mxu0 %v97
    %v1266 = vpop.f32.mrf.mxu0
    %v1267 = vadd.f32 %v1254, %v1266
    %v1268 = vpop.f32.mrf.mxu0
    %1269 = vdwg.mxu0
    %1270 = vmatpush.bf16.msra.mxu0 %v966
    %1271 = vmatpush.bf16.msra.mxu0 %v965
    %1272 = vmatpush.bf16.msra.mxu0 %v964
    %1273 = vmatpush.bf16.msra.mxu0 %v963
    %1274 = vmatpush.bf16.msra.mxu0 %v962
    %1275 = vmatpush.bf16.msra.mxu0 %v961
    %1276 = vmatpush.bf16.msra.mxu0 %v960
    %1277 = vmatpush.bf16.msra.mxu0 %v959
    %1278 = vmatmul.bf16.gmra.mxu0 %v98
    %v1279 = vpop.f32.mrf.mxu0
    %v1280 = vadd.f32 %v1267, %v1279
    %v1281 = vpop.f32.mrf.mxu0
    %1282 = vdwg.mxu0
    %1283 = vmatpush.bf16.msra.mxu0 %v974
    %1284 = vmatpush.bf16.msra.mxu0 %v973
    %1285 = vmatpush.bf16.msra.mxu0 %v972
    %1286 = vmatpush.bf16.msra.mxu0 %v971
    %1287 = vmatpush.bf16.msra.mxu0 %v970
    %1288 = vmatpush.bf16.msra.mxu0 %v969
    %1289 = vmatpush.bf16.msra.mxu0 %v968
    %1290 = vmatpush.bf16.msra.mxu0 %v967
    %1291 = vmatmul.bf16.gmra.mxu0 %v99
    %v1292 = vpop.f32.mrf.mxu0
    %v1293 = vadd.f32 %v1280, %v1292
    %v1294 = vpop.f32.mrf.mxu0
    %1295 = vdwg.mxu0
    %1296 = vmatpush.bf16.msra.mxu0 %v982
    %1297 = vmatpush.bf16.msra.mxu0 %v981
    %1298 = vmatpush.bf16.msra.mxu0 %v980
    %1299 = vmatpush.bf16.msra.mxu0 %v979
    %1300 = vmatpush.bf16.msra.mxu0 %v978
    %1301 = vmatpush.bf16.msra.mxu0 %v977
    %1302 = vmatpush.bf16.msra.mxu0 %v976
    %1303 = vmatpush.bf16.msra.mxu0 %v975
    %1304 = vmatmul.bf16.gmra.mxu0 %v100
    %v1305 = vpop.f32.mrf.mxu0
    %v1306 = vadd.f32 %v1293, %v1305
    %v1307 = vpop.f32.mrf.mxu0
    %1308 = vdwg.mxu0
    %1309 = vmatpush.bf16.msra.mxu0 %v990
    %1310 = vmatpush.bf16.msra.mxu0 %v989
    %1311 = vmatpush.bf16.msra.mxu0 %v988
    %1312 = vmatpush.bf16.msra.mxu0 %v987
    %1313 = vmatpush.bf16.msra.mxu0 %v986
    %1314 = vmatpush.bf16.msra.mxu0 %v985
    %1315 = vmatpush.bf16.msra.mxu0 %v984
    %1316 = vmatpush.bf16.msra.mxu0 %v983
    %1317 = vmatmul.bf16.gmra.mxu0 %v101
    %v1318 = vpop.f32.mrf.mxu0
    %v1319 = vadd.f32 %v1306, %v1318
    %v1320 = vpop.f32.mrf.mxu0
    %1321 = vdwg.mxu0
    %1322 = vmatpush.bf16.msra.mxu0 %v998
    %1323 = vmatpush.bf16.msra.mxu0 %v997
    %1324 = vmatpush.bf16.msra.mxu0 %v996
    %1325 = vmatpush.bf16.msra.mxu0 %v995
    %1326 = vmatpush.bf16.msra.mxu0 %v994
    %1327 = vmatpush.bf16.msra.mxu0 %v993
    %1328 = vmatpush.bf16.msra.mxu0 %v992
    %1329 = vmatpush.bf16.msra.mxu0 %v991
    %1330 = vmatmul.bf16.gmra.mxu0 %v102
    %v1331 = vpop.f32.mrf.mxu0
    %v1332 = vadd.f32 %v1319, %v1331
    %v1333 = vpop.f32.mrf.mxu0
    %1334 = vdwg.mxu0
    %1335 = vst [vmem:[#allocation7] sm:$0x3] %v1332
    // Predicated region
    $region18: #{tpu_custom_call.1} parent=1 // pred_check
      _
    $region19: #{tpu_custom_call.1} parent=1 // pred_check_branch
      %1337 = sbr.rel (0) target = $region21
    $region20: #{tpu_custom_call.1} parent=1 // pred_region
      %1339 = vsyncadd [#allocation4], 0
      %s1341 = sshll.u32 [#allocation7], 4
      %s1342 = int_to_ptr.vmem [resolvable:$true] %s1341
      %s1343 = sshll.u32 %s2, 4
      %s1344 = int_to_ptr.hbm [resolvable:$true] %s1343
      %1346 = dma.vmem_to_hbm [thread:$0]  %s1342, 32, %s1344, [#allocation4]
    $region21: #{tpu_custom_call.1} parent=1 // pred_fallthru
      _
    // Predicated region
    $region22: #{tpu_custom_call.1} parent=1 // pred_check
      _
    $region23: #{tpu_custom_call.1} parent=1 // pred_check_branch
      %1348 = sbr.rel (0) target = $region25
    $region24: #{tpu_custom_call.1} parent=1 // pred_region
      %1350 = dma.done [#allocation4], 32
    $region25: #{tpu_custom_call.1} parent=1 // pred_fallthru
      _
    %1351 = vsyncpa [#allocation3], 1
    %1352 = vsyncpa [#allocation6], 1
    %1353 = vsyncpa [#allocation4], 1

</llo_original>
